<compile_context>
chip_gen: v7x
topology: tpu7x:2x2x1
jax: 0.10.0
libtpu: 0.0.40
codegen_flags: <defaults>
</compile_context>

<pallas_src>
from typing import NamedTuple

import jax
import jax.numpy as jnp
from jax.experimental import pallas as pl
from jax.experimental.pallas import tpu as pltpu


_NEG_INF = -1e30  # finite stand-in for -inf: padded logits never win the max / add to the sum


def _round_up(x, m):
    return ((x + m - 1) // m) * m


def _vmem_budgets():
    """Return (tile-picker budget, scoped vmem limit) derived from the chip's VMEM."""
    cap = None
    try:
        cap = getattr(pltpu.get_tpu_info(), "vmem_capacity_bytes", None)
    except Exception:
        cap = None
    if cap is None:
        cap = 64 * 1024 * 1024  # conservative (v7x-sized) default
    if cap <= 64 * 1024 * 1024:
        # v7x: 64 MiB per TensorCore -> leave headroom for compiler internal scratch.
        return 24 * 1024 * 1024, 40 * 1024 * 1024
    # v5e / v6e: 128 MiB -> unlock large node tiles.
    return 64 * 1024 * 1024, 100 * 1024 * 1024


def _log_softmax(z):
    m = jnp.max(z, axis=-1, keepdims=True)
    s = z - m
    lse = jnp.log(jnp.sum(jnp.exp(s), axis=-1, keepdims=True))
    return s - lse


def _altopt_fused_kernel(x_ref, w1_ref, b1_ref, w2_ref, b2_ref, o_ref):
    """Single-K-step path: matmul1 + bias + ReLU + matmul2 + bias + log_softmax fused.

    x arrives in its native dtype (f32) and is cast to the MXU compute dtype in-vreg;
    no VMEM scratch accumulator is needed.
    """
    x = x_ref[...].astype(w1_ref.dtype)
    h = jnp.dot(x, w1_ref[...], preferred_element_type=jnp.float32)
    h = jnp.maximum(h + b1_ref[...], 0.0)          # Dropout == identity in eval mode
    z = jnp.dot(h.astype(w2_ref.dtype), w2_ref[...],
                preferred_element_type=jnp.float32)
    z = z + b2_ref[...]
    # Module appends LogSoftmax twice for loss=='CE'; the second pass is the identity,
    # so apply it once.
    o_ref[...] = _log_softmax(z).astype(o_ref.dtype)


def _altopt_ktiled_kernel(x_ref, w1_ref, b1_ref, w2_ref, b2_ref, o_ref, h_acc):
    """K-tiled path (only used when w1 does not fit VMEM). grid = (num_m, num_k),
    K last / "arbitrary". First K step writes the accumulator (no zero-fill)."""
    k = pl.program_id(1)
    part = jnp.dot(x_ref[...].astype(w1_ref.dtype), w1_ref[...],
                   preferred_element_type=jnp.float32)

    @pl.when(k == 0)
    def _():
        h_acc[...] = part

    @pl.when(k > 0)
    def _():
        h_acc[...] += part

    @pl.when(k == pl.num_programs(1) - 1)
    def _():
        h = jnp.maximum(h_acc[...] + b1_ref[...], 0.0)
        z = jnp.dot(h.astype(w2_ref.dtype), w2_ref[...],
                    preferred_element_type=jnp.float32)
        z = z + b2_ref[...]
        o_ref[...] = _log_softmax(z).astype(o_ref.dtype)


class ALTOPTParams(NamedTuple):
    w1: jax.Array   # (Cin_p, Hp) compute dtype, zero-padded
    b1: jax.Array   # (1, Hp)     f32, padded entries are 0 (ReLU-safe)
    w2: jax.Array   # (Hp, Cp)    compute dtype, padded rows/cols are 0
    b2: jax.Array   # (1, Cp)     f32, padded entries are _NEG_INF
    cin: int
    cin_p: int
    hp: int
    cout: int
    cp: int
    tk: int


def prepare_altopt_params(w1, b1, w2, b2, *, compute_dtype=jnp.bfloat16, tk=None):
    """Cast / pad the weights once (hoisted out of the per-call forward)."""
    Cin, H = w1.shape
    H2, Cout = w2.shape
    assert H2 == H and b1.shape == (H,) and b2.shape == (Cout,)

    in_bytes = jnp.dtype(compute_dtype).itemsize
    budget, _ = _vmem_budgets()

    # Lane-dense hidden and class dims (multiples of 128).
    Hp = max(128, _round_up(H, 128))
    Cp = max(128, _round_up(Cout, 128))

    # Only tile K when w1 itself would blow the VMEM budget; otherwise keep it fully
    # resident (constant index_map) with a single K grid step.
    if tk is None:
        tk = Cin if (2 * Cin * Hp * in_bytes <= budget // 2) else 2048
    Cin_p = _round_up(Cin, tk)

    w1c = jnp.pad(w1.astype(compute_dtype), ((0, Cin_p - Cin), (0, Hp - H)))
    b1p = jnp.pad(b1.astype(jnp.float32), (0, Hp - H)).reshape(1, Hp)
    w2c = jnp.pad(w2.astype(compute_dtype), ((0, Hp - H), (0, Cp - Cout)))
    b2p = jnp.pad(b2.astype(jnp.float32).reshape(1, Cout), ((0, 0), (0, Cp - Cout)),
                  constant_values=_NEG_INF)
    return ALTOPTParams(w1c, b1p, w2c, b2p, Cin, Cin_p, Hp, Cout, Cp, tk)


def _pick_tm(N, tk, Hp, Cp, x_bytes, in_bytes, out_bytes, budget, ktiled):
    """Largest node tile (multiple of the bf16 sublane tile, 16) fitting the budget,
    while keeping >= 2 node tiles (when N allows) so both v7x TensorCores get work."""
    n16 = _round_up(max(N, 1), 16)
    fixed = 2 * (tk * Hp * in_bytes + Hp * 4 + Hp * Cp * in_bytes + Cp * 4)
    want_two_tiles = N >= 32
    for tm in (2048, 1024, 512, 256, 128, 64, 32, 16):
        if tm > n16:
            continue
        if want_two_tiles and tm >= N and tm > 16:
            continue
        per_step = 2 * tm * tk * x_bytes + 2 * tm * Cp * out_bytes + tm * Hp * 4
        if fixed + per_step <= budget:
            return tm
    return 16


def altopt_forward(x, params: ALTOPTParams, *, tm=None, out_dtype=jnp.bfloat16):
    """ALTOPT eval forward (useGCN=False): Dropout(id) -> Linear -> ReLU -> Dropout(id)
    -> Linear -> LogSoftmax (applied twice in the module; second is the identity)."""
    N, Cin = x.shape
    assert Cin == params.cin

    x_bytes = jnp.dtype(x.dtype).itemsize
    in_bytes = jnp.dtype(params.w1.dtype).itemsize
    out_bytes = jnp.dtype(out_dtype).itemsize
    budget, vmem_limit = _vmem_budgets()

    tk = params.tk
    num_k = params.cin_p // tk
    ktiled = num_k > 1

    if tm is None:
        tm = _pick_tm(N, tk, params.hp, params.cp, x_bytes, in_bytes, out_bytes,
                      budget, ktiled)
    N_p = _round_up(N, tm)

    # x stays in its native dtype (the bf16 cast happens in-kernel); pad only when
    # the row count / K extent requires it.
    if N_p != N or params.cin_p != Cin:
        x = jnp.pad(x, ((0, N_p - N), (0, params.cin_p - Cin)))

    num_m = N_p // tm
    Hp, Cp = params.hp, params.cp

    if not ktiled:
        grid = (num_m,)
        in_specs = [
            pl.BlockSpec((tm, tk), lambda i: (i, 0)),   # x row tile (native dtype)
            pl.BlockSpec((tk, Hp), lambda i: (0, 0)),   # w1 fully resident
            pl.BlockSpec((1, Hp), lambda i: (0, 0)),    # b1
            pl.BlockSpec((Hp, Cp), lambda i: (0, 0)),   # w2
            pl.BlockSpec((1, Cp), lambda i: (0, 0)),    # b2
        ]
        out_specs = pl.BlockSpec((tm, Cp), lambda i: (i, 0))
        kernel = _altopt_fused_kernel
        scratch = ()
        dims = ("parallel",)
    else:
        grid = (num_m, num_k)
        in_specs = [
            pl.BlockSpec((tm, tk), lambda i, k: (i, k)),   # x row / K tile
            pl.BlockSpec((tk, Hp), lambda i, k: (k, 0)),   # w1 K slab
            pl.BlockSpec((1, Hp), lambda i, k: (0, 0)),    # b1
            pl.BlockSpec((Hp, Cp), lambda i, k: (0, 0)),   # w2
            pl.BlockSpec((1, Cp), lambda i, k: (0, 0)),    # b2
        ]
        out_specs = pl.BlockSpec((tm, Cp), lambda i, k: (i, 0))
        kernel = _altopt_ktiled_kernel
        scratch = (pltpu.VMEM((tm, Hp), jnp.float32),)
        dims = ("parallel", "arbitrary")

    out = pl.pallas_call(
        kernel,
        out_shape=jax.ShapeDtypeStruct((N_p, Cp), out_dtype),
        grid_spec=pltpu.PrefetchScalarGridSpec(
            num_scalar_prefetch=0,
            grid=grid,
            in_specs=in_specs,
            out_specs=out_specs,
            scratch_shapes=scratch,
        ),
        compiler_params=pltpu.CompilerParams(
            dimension_semantics=dims,
            vmem_limit_bytes=vmem_limit,
        ),
    )(x, params.w1, params.b1, params.w2, params.b2)

    return out[:N, :params.cout]


def _init_linear(key, fan_in, fan_out, dtype=jnp.float32):
    # Deterministic stand-in for torch.nn.Linear default init (uniform +/- 1/sqrt(fan_in)).
    kw, kb = jax.random.split(key)
    bound = 1.0 / jnp.sqrt(jnp.asarray(fan_in, dtype))
    w = jax.random.uniform(kw, (fan_in, fan_out), dtype, minval=-bound, maxval=bound)
    b = jax.random.uniform(kb, (fan_out,), dtype, minval=-bound, maxval=bound)
    return w, b


def _reference(x, w1, b1, w2, b2, compute_dtype=jnp.bfloat16):
    # Emulates the kernel's bf16-input / f32-accumulate numerics.
    f32 = jnp.float32
    cast = lambda a: a.astype(compute_dtype).astype(f32)
    h = jnp.maximum(
        jnp.dot(cast(x), cast(w1), precision=jax.lax.Precision.HIGHEST) + b1.astype(f32),
        0.0)
    z = jnp.dot(cast(h), cast(w2), precision=jax.lax.Precision.HIGHEST) + b2.astype(f32)
    z = jax.nn.log_softmax(z, axis=-1)
    z = jax.nn.log_softmax(z, axis=-1)  # module applies it twice (second is identity)
    return z


if __name__ == "__main__":
    # Small synthetic shapes consistent with the module:
    #   N nodes, in_channels, hidden_channels, out_channels (classes).
    N, Cin, H, Cout = 500, 256, 64, 10

    key = jax.random.PRNGKey(0)
    kx, k1, k2 = jax.random.split(key, 3)
    x = jax.random.normal(kx, (N, Cin), jnp.float32)
    w1, b1 = _init_linear(k1, Cin, H)
    w2, b2 = _init_linear(k2, H, Cout)

    ref = _reference(x, w1, b1, w2, b2)

    # Path 1: default config (fully resident w1, fused single-K kernel, 2 node tiles),
    # f32 output for a tight numerical check.
    params = prepare_altopt_params(w1, b1, w2, b2)
    out = altopt_forward(x, params, out_dtype=jnp.float32)
    out = jax.block_until_ready(out)
    assert out.shape == (N, Cout)
    assert bool(jnp.all(jnp.isfinite(out)))
    assert jnp.allclose(out, ref, atol=1e-3, rtol=1e-3)

    # Path 2: forced K tiling (exercises the accumulator kernel) with the recommended
    # low-traffic bf16 output.
    params_kt = prepare_altopt_params(w1, b1, w2, b2, tk=128)
    out_bf16 = altopt_forward(x, params_kt)   # out_dtype defaults to bf16
    out_bf16 = jax.block_until_ready(out_bf16)
    assert out_bf16.shape == (N, Cout)
    assert jnp.allclose(out_bf16.astype(jnp.float32), ref, atol=3e-2, rtol=3e-2)

    # TODO(synk): graph propagation (self.prop / the GCN branch) is sparse message
    # passing over adj_t and is not part of the dense lins forward implemented here.
    print("KERNEL_OK")
</pallas_src>

<mosaic_0001>
module attributes {stable_mosaic.version = 11 : i64} {
  func.func @_altopt_fused_kernel(%arg0: i32, %arg1: memref<256x256xf32, #tpu.memory_space<vmem>>, %arg2: memref<256x128xbf16, #tpu.memory_space<vmem>>, %arg3: memref<1x128xf32, #tpu.memory_space<vmem>>, %arg4: memref<128x128xbf16, #tpu.memory_space<vmem>>, %arg5: memref<1x128xf32, #tpu.memory_space<vmem>>, %arg6: memref<256x128xf32, #tpu.memory_space<vmem>>) attributes {dimension_semantics = [#tpu.dimension_semantics<parallel>], iteration_bounds = array<i64: 2>, scalar_prefetch = 0 : i64, scratch_operands = 0 : i64, tpu.core_type = #tpu.core_type<tc>, window_params = [{transform_indices = @transform_0, window_bounds = array<i64: 256, 256>}, {pipeline_mode = #tpu.pipeline_mode<synchronous>, transform_indices = @transform_1, window_bounds = array<i64: 256, 128>}, {pipeline_mode = #tpu.pipeline_mode<synchronous>, transform_indices = @transform_2, window_bounds = array<i64: 1, 128>}, {pipeline_mode = #tpu.pipeline_mode<synchronous>, transform_indices = @transform_3, window_bounds = array<i64: 128, 128>}, {pipeline_mode = #tpu.pipeline_mode<synchronous>, transform_indices = @transform_4, window_bounds = array<i64: 1, 128>}, {transform_indices = @transform_5, window_bounds = array<i64: 256, 128>}]} {
    %c0 = arith.constant 0 : index
    %c0_0 = arith.constant 0 : index
    %0 = vector.load %arg1[%c0, %c0_0] : memref<256x256xf32, #tpu.memory_space<vmem>>, vector<256x256xf32>
    %1 = arith.truncf %0 : vector<256x256xf32> to vector<256x256xbf16>
    %c0_1 = arith.constant 0 : index
    %c0_2 = arith.constant 0 : index
    %2 = vector.load %arg2[%c0_1, %c0_2] : memref<256x128xbf16, #tpu.memory_space<vmem>>, vector<256x128xbf16>
    %cst = arith.constant dense<0.000000e+00> : vector<256x128xf32>
    %3 = tpu.matmul %1, %2, %cst {dimension_numbers = #tpu.dot_dimension_numbers<[1], [0], [0], [1], [0, 0, 1, 1], [], []>} : vector<256x256xbf16>, vector<256x128xbf16>, vector<256x128xf32> -> vector<256x128xf32>
    %c0_3 = arith.constant 0 : index
    %c0_4 = arith.constant 0 : index
    %4 = vector.load %arg3[%c0_3, %c0_4] : memref<1x128xf32, #tpu.memory_space<vmem>>, vector<1x128xf32>
    %5 = vector.broadcast %4 : vector<1x128xf32> to vector<256x128xf32>
    %6 = arith.addf %3, %5 : vector<256x128xf32>
    %cst_5 = arith.constant 0.000000e+00 : f32
    %7 = vector.broadcast %cst_5 : f32 to vector<256x128xf32>
    %8 = arith.maximumf %6, %7 : vector<256x128xf32>
    %9 = arith.truncf %8 : vector<256x128xf32> to vector<256x128xbf16>
    %c0_6 = arith.constant 0 : index
    %c0_7 = arith.constant 0 : index
    %10 = vector.load %arg4[%c0_6, %c0_7] : memref<128x128xbf16, #tpu.memory_space<vmem>>, vector<128x128xbf16>
    %cst_8 = arith.constant dense<0.000000e+00> : vector<256x128xf32>
    %11 = tpu.matmul %9, %10, %cst_8 {dimension_numbers = #tpu.dot_dimension_numbers<[1], [0], [0], [1], [0, 0, 1, 1], [], []>} : vector<256x128xbf16>, vector<128x128xbf16>, vector<256x128xf32> -> vector<256x128xf32>
    %c0_9 = arith.constant 0 : index
    %c0_10 = arith.constant 0 : index
    %12 = vector.load %arg5[%c0_9, %c0_10] : memref<1x128xf32, #tpu.memory_space<vmem>>, vector<1x128xf32>
    %13 = vector.broadcast %12 : vector<1x128xf32> to vector<256x128xf32>
    %14 = arith.addf %11, %13 : vector<256x128xf32>
    %cst_11 = arith.constant dense<0xFF800000> : vector<256xf32>
    %15 = vector.multi_reduction <maximumf>, %14, %cst_11 [1] : vector<256x128xf32> to vector<256xf32>
    %16 = vector.shape_cast %15 : vector<256xf32> to vector<256x1xf32>
    %17 = vector.broadcast %16 : vector<256x1xf32> to vector<256x128xf32>
    %18 = arith.subf %14, %17 : vector<256x128xf32>
    %19 = math.exp %18 : vector<256x128xf32>
    %cst_12 = arith.constant dense<0.000000e+00> : vector<256xf32>
    %20 = vector.multi_reduction <add>, %19, %cst_12 [1] : vector<256x128xf32> to vector<256xf32>
    %21 = vector.shape_cast %20 : vector<256xf32> to vector<256x1xf32>
    %22 = math.log %21 : vector<256x1xf32>
    %23 = vector.broadcast %22 : vector<256x1xf32> to vector<256x128xf32>
    %24 = arith.subf %18, %23 : vector<256x128xf32>
    %c0_13 = arith.constant 0 : index
    %c0_14 = arith.constant 0 : index
    %25 = vector.load %arg6[%c0_13, %c0_14] : memref<256x128xf32, #tpu.memory_space<vmem>>, vector<256x128xf32>
    tpu.vector_store %arg6[%c0_13, %c0_14], %24 {strides = array<i32>} : memref<256x128xf32, #tpu.memory_space<vmem>>, vector<256x128xf32>,
    return
  }
  func.func @transform_0(%arg0: i32) -> (i32, i32) {
    %c0_i32 = arith.constant 0 : i32
    %c0_i32_0 = arith.constant 0 : i32
    return %arg0, %c0_i32 : i32, i32
  }
  func.func @transform_1(%arg0: i32) -> (i32, i32) {
    %c0_i32 = arith.constant 0 : i32
    %c0_i32_0 = arith.constant 0 : i32
    %c0_i32_1 = arith.constant 0 : i32
    return %c0_i32, %c0_i32_0 : i32, i32
  }
  func.func @transform_2(%arg0: i32) -> (i32, i32) {
    %c0_i32 = arith.constant 0 : i32
    %c0_i32_0 = arith.constant 0 : i32
    %c0_i32_1 = arith.constant 0 : i32
    return %c0_i32, %c0_i32_0 : i32, i32
  }
  func.func @transform_3(%arg0: i32) -> (i32, i32) {
    %c0_i32 = arith.constant 0 : i32
    %c0_i32_0 = arith.constant 0 : i32
    %c0_i32_1 = arith.constant 0 : i32
    return %c0_i32, %c0_i32_0 : i32, i32
  }
  func.func @transform_4(%arg0: i32) -> (i32, i32) {
    %c0_i32 = arith.constant 0 : i32
    %c0_i32_0 = arith.constant 0 : i32
    %c0_i32_1 = arith.constant 0 : i32
    return %c0_i32, %c0_i32_0 : i32, i32
  }
  func.func @transform_5(%arg0: i32) -> (i32, i32) {
    %c0_i32 = arith.constant 0 : i32
    %c0_i32_0 = arith.constant 0 : i32
    return %arg0, %c0_i32 : i32, i32
  }
}

</mosaic_0001>

<llo_original>
// kernel: tpu_custom_call.1
$region0: #{tpu_custom_call.1}
  #allocation0 [shape = 'u32[]', space=smem, size = 0x4, offset = 0x4, fixed_abs, tag = 'smem constant byte address 0x4 - core index']
  #allocation1 [shape = 'u32[144,128]{1,0:T(1,128)}', space=vmem, size = 0x12000, scoped, tag = 'internal scratch']
  %s0 = inlined_call_operand.hbm [shape: f32[512,256], index: 0, kind: input, shape index: {}]
  %s1 = inlined_call_operand.hbm [shape: bf16[256,128], index: 1, kind: input, shape index: {}]
  %s2 = inlined_call_operand.vmem [shape: f32[1,128], index: 2, kind: input, shape index: {}]
  %s3 = inlined_call_operand.hbm [shape: bf16[128,128], index: 3, kind: input, shape index: {}]
  %s4 = inlined_call_operand.vmem [shape: f32[1,128], index: 4, kind: input, shape index: {}]
  %s5 = inlined_call_operand.hbm [shape: f32[512,128], index: 5, kind: output, shape index: {}]
  %s6 = sld [smem:[#allocation0]]
  $region65: #{tpu_custom_call.1} parent=0
    _
  %s8 = ssub.s32 1, %s6
  %s9 = scalar_select 0, %s8, %s6
  $region1: #{tpu_custom_call.1} parent=0
    #allocation2 [shape = 'u8[524288]{0}', space=vmem, size = 0x80000, scoped, tag = 'input window, operand 0']
    #allocation3 [shape = 's32[2]{0}', space=sflag, size = 0x8, scoped, tag = 'scoped memory for tpu_custom_call.1']
    #allocation4 [shape = 's32[2]{0}', space=sflag, size = 0x8, scoped, tag = 'scoped memory for tpu_custom_call.1']
    #allocation5 [shape = 'u8[65536]{0}', space=vmem, size = 0x10000, scoped, tag = 'input window, operand 1, single buffered']
    #allocation6 [shape = 's32[1]{0}', space=sflag, size = 0x4, scoped, tag = 'scoped memory for tpu_custom_call.1']
    #allocation7 [shape = 'u8[32768]{0}', space=vmem, size = 0x8000, scoped, tag = 'input window, operand 3, single buffered']
    #allocation8 [shape = 'u8[262144]{0}', space=vmem, size = 0x40000, scoped, tag = 'output window, operand 0']
    %10 = vsyncpa [#allocation3], 0
    %s11 = scalar_lea.sflag [#allocation3], 1
    %12 = vsyncpa %s11, 0
    %13 = vsyncpa [#allocation6], 0
    %14 = vsyncpa [#allocation4], 0
    %s15 = scalar_lea.sflag [#allocation4], 1
    %16 = vsyncpa %s15, 0
    loop: start=0, step=1, limit=4
    $region2: #{tpu_custom_call.1} parent=1 // loop_pre_header
      _
    $region3: #{tpu_custom_call.1} parent=1 // loop_header
      %s18 = sphi 0, %s22
      %p19 = scmp.ge.s32.totalorder %s18, 4
      %s28 = sphi 0, %s30
      %s31 = sphi 0, %s28
      %s32 = sphi 0, %s31
      %s48 = sphi 0, %s32
      %s52 = sphi 0, %s52
      %s54 = sphi 0, %s52
      %s55 = sphi 0, %s54
      %s69 = sphi 0, %s55
      %s73 = sphi 0, %s73
      %s75 = sphi 0, %s73
      %s76 = sphi 0, %s75
      %s90 = sphi 0, %s76
      %s94 = sphi 0, %s94
      %s96 = sphi 0, %s94
      %s97 = sphi 0, %s96
      %s111 = sphi 0, %s97
      %s115 = sphi 0, %s115
      %s117 = sphi 0, %s115
      %s118 = sphi 0, %s117
      %s132 = sphi 0, %s118
      %s138 = sphi 0, %s140
      %s141 = sphi 0, %s138
      %s142 = sphi 0, %s141
      %s158 = sphi 0, %s142
    $region4: #{tpu_custom_call.1} parent=1 // loop_header_branch
      %21 = sbr.rel (%p19) target = $region8
    $region5: #{tpu_custom_call.1} parent=1 // loop_body
      %s23 = ssub.s32 %s18, 1
      %s24 = ssub.s32 %s18, 2
      %s25 = sadd.s32 %s18, 1
      %s26 = ssub.s32 %s18, %s25
      %p27 = scmp.eq.s32.totalorder %s26, 0
      %s29 = sadd.s32 %s28, 1
      %s30 = scalar_select %p27, %s28, %s29
      %p33 = pneg %p27
      %p34 = scmp.eq.s32.totalorder %s18, 1
      %p35 = por %p33, %p34
      %p36 = scmp.ne.s32.totalorder %s28, %s31
      %p37 = scmp.eq.s32.totalorder %s18, 0
      %p38 = por %p36, %p37
      %p39 = scmp.ne.s32.totalorder %s28, %s31
      %p40 = scmp.eq.s32.totalorder %s23, 1
      %p41 = por %p39, %p40
      %p42 = scmp.ne.s32.totalorder %s31, %s32
      %p43 = scmp.eq.s32.totalorder %s23, 0
      %p44 = por %p42, %p43
      %p45 = scmp.ne.s32.totalorder %s31, %s32
      %p46 = scmp.eq.s32.totalorder %s24, 1
      %p47 = por %p45, %p46
      %p49 = scmp.ne.s32.totalorder %s32, %s48
      %p50 = scmp.eq.s32.totalorder %s24, 0
      %p51 = por %p49, %p50
      %s53 = sadd.s32 %s52, 1
      %p56 = scmp.eq.s32.totalorder %s18, 1
      %p57 = scmp.ne.s32.totalorder %s52, %s54
      %p58 = scmp.eq.s32.totalorder %s18, 0
      %p59 = por %p57, %p58
      %p60 = scmp.ne.s32.totalorder %s52, %s54
      %p61 = scmp.eq.s32.totalorder %s23, 1
      %p62 = por %p60, %p61
      %p63 = scmp.ne.s32.totalorder %s54, %s55
      %p64 = scmp.eq.s32.totalorder %s23, 0
      %p65 = por %p63, %p64
      %p66 = scmp.ne.s32.totalorder %s54, %s55
      %p67 = scmp.eq.s32.totalorder %s24, 1
      %p68 = por %p66, %p67
      %p70 = scmp.ne.s32.totalorder %s55, %s69
      %p71 = scmp.eq.s32.totalorder %s24, 0
      %p72 = por %p70, %p71
      %s74 = sadd.s32 %s73, 1
      %p77 = scmp.eq.s32.totalorder %s18, 1
      %p78 = scmp.ne.s32.totalorder %s73, %s75
      %p79 = scmp.eq.s32.totalorder %s18, 0
      %p80 = por %p78, %p79
      %p81 = scmp.ne.s32.totalorder %s73, %s75
      %p82 = scmp.eq.s32.totalorder %s23, 1
      %p83 = por %p81, %p82
      %p84 = scmp.ne.s32.totalorder %s75, %s76
      %p85 = scmp.eq.s32.totalorder %s23, 0
      %p86 = por %p84, %p85
      %p87 = scmp.ne.s32.totalorder %s75, %s76
      %p88 = scmp.eq.s32.totalorder %s24, 1
      %p89 = por %p87, %p88
      %p91 = scmp.ne.s32.totalorder %s76, %s90
      %p92 = scmp.eq.s32.totalorder %s24, 0
      %p93 = por %p91, %p92
      %s95 = sadd.s32 %s94, 1
      %p98 = scmp.eq.s32.totalorder %s18, 1
      %p99 = scmp.ne.s32.totalorder %s94, %s96
      %p100 = scmp.eq.s32.totalorder %s18, 0
      %p101 = por %p99, %p100
      %p102 = scmp.ne.s32.totalorder %s94, %s96
      %p103 = scmp.eq.s32.totalorder %s23, 1
      %p104 = por %p102, %p103
      %p105 = scmp.ne.s32.totalorder %s96, %s97
      %p106 = scmp.eq.s32.totalorder %s23, 0
      %p107 = por %p105, %p106
      %p108 = scmp.ne.s32.totalorder %s96, %s97
      %p109 = scmp.eq.s32.totalorder %s24, 1
      %p110 = por %p108, %p109
      %p112 = scmp.ne.s32.totalorder %s97, %s111
      %p113 = scmp.eq.s32.totalorder %s24, 0
      %p114 = por %p112, %p113
      %s116 = sadd.s32 %s115, 1
      %p119 = scmp.eq.s32.totalorder %s18, 1
      %p120 = scmp.ne.s32.totalorder %s115, %s117
      %p121 = scmp.eq.s32.totalorder %s18, 0
      %p122 = por %p120, %p121
      %p123 = scmp.ne.s32.totalorder %s115, %s117
      %p124 = scmp.eq.s32.totalorder %s23, 1
      %p125 = por %p123, %p124
      %p126 = scmp.ne.s32.totalorder %s117, %s118
      %p127 = scmp.eq.s32.totalorder %s23, 0
      %p128 = por %p126, %p127
      %p129 = scmp.ne.s32.totalorder %s117, %s118
      %p130 = scmp.eq.s32.totalorder %s24, 1
      %p131 = por %p129, %p130
      %p133 = scmp.ne.s32.totalorder %s118, %s132
      %p134 = scmp.eq.s32.totalorder %s24, 0
      %p135 = por %p133, %p134
      %s136 = ssub.s32 %s18, %s25
      %p137 = scmp.eq.s32.totalorder %s136, 0
      %s139 = sadd.s32 %s138, 1
      %s140 = scalar_select %p137, %s138, %s139
      %p143 = pneg %p137
      %p144 = scmp.eq.s32.totalorder %s18, 1
      %p145 = por %p143, %p144
      %p146 = scmp.ne.s32.totalorder %s138, %s141
      %p147 = scmp.eq.s32.totalorder %s18, 0
      %p148 = por %p146, %p147
      %p149 = scmp.ne.s32.totalorder %s138, %s141
      %p150 = scmp.eq.s32.totalorder %s23, 1
      %p151 = por %p149, %p150
      %p152 = scmp.ne.s32.totalorder %s141, %s142
      %p153 = scmp.eq.s32.totalorder %s23, 0
      %p154 = por %p152, %p153
      %p155 = scmp.ne.s32.totalorder %s141, %s142
      %p156 = scmp.eq.s32.totalorder %s24, 1
      %p157 = por %p155, %p156
      %p159 = scmp.ne.s32.totalorder %s142, %s158
      %p160 = scmp.eq.s32.totalorder %s24, 0
      %p161 = por %p159, %p160
      %p162 = scmp.le.s32.totalorder 1, %s18
      %p163 = scmp.lt.s32.totalorder %s18, 3
      %p164 = pnand %p162, %p163
      %p165 = pneg %p164
      // Predicated region
      $region9: #{tpu_custom_call.1} parent=5 // pred_check
        _
      $region10: #{tpu_custom_call.1} parent=5 // pred_check_branch
        %167 = sbr.rel (%p164) target = $region12
      $region11: #{tpu_custom_call.1} parent=5 // pred_region
        %s168 = ssub.s32 %s18, 1
        // Predicated region
        $region13: #{tpu_custom_call.1} parent=11 // pred_check
          %p169 = pneg %p65
        $region14: #{tpu_custom_call.1} parent=11 // pred_check_branch
          %171 = sbr.rel (%p169) target = $region16
        $region15: #{tpu_custom_call.1} parent=11 // pred_region
          %s173 = ssub.s32 2048, 2048
          %174 = vsyncadd [#allocation6], %s173
          %s175 = sshll.u32 [#allocation5], 4
          %s176 = int_to_ptr.vmem [resolvable:$true] %s175
          %181 = dma.hbm_to_vmem [thread:$0]  %s1, 2048, %s176, [#allocation6], 64, 64, 4
        $region16: #{tpu_custom_call.1} parent=11 // pred_fallthru
          _
        // Predicated region
        $region17: #{tpu_custom_call.1} parent=11 // pred_check
          %p182 = pneg %p86
        $region18: #{tpu_custom_call.1} parent=11 // pred_check_branch
          %184 = sbr.rel (%p182) target = $region20
        $region19: #{tpu_custom_call.1} parent=11 // pred_region
          _
        $region20: #{tpu_custom_call.1} parent=11 // pred_fallthru
          _
        // Predicated region
        $region21: #{tpu_custom_call.1} parent=11 // pred_check
          %p185 = pneg %p107
        $region22: #{tpu_custom_call.1} parent=11 // pred_check_branch
          %187 = sbr.rel (%p185) target = $region24
        $region23: #{tpu_custom_call.1} parent=11 // pred_region
          %s189 = ssub.s32 1024, 1024
          %190 = vsyncadd [#allocation6], %s189
          %s191 = sshll.u32 [#allocation7], 4
          %s192 = int_to_ptr.vmem [resolvable:$true] %s191
          %197 = dma.hbm_to_vmem [thread:$0]  %s3, 1024, %s192, [#allocation6], 64, 64, 4
        $region24: #{tpu_custom_call.1} parent=11 // pred_fallthru
          _
        // Predicated region
        $region25: #{tpu_custom_call.1} parent=11 // pred_check
          %p198 = pneg %p128
        $region26: #{tpu_custom_call.1} parent=11 // pred_check_branch
          %200 = sbr.rel (%p198) target = $region28
        $region27: #{tpu_custom_call.1} parent=11 // pred_region
          _
        $region28: #{tpu_custom_call.1} parent=11 // pred_fallthru
          _
      $region12: #{tpu_custom_call.1} parent=5 // pred_fallthru
        _
      %p201 = scmp.lt.s32.totalorder %s18, 2
      // Predicated region
      $region29: #{tpu_custom_call.1} parent=5 // pred_check
        %p202 = pneg %p201
      $region30: #{tpu_custom_call.1} parent=5 // pred_check_branch
        %204 = sbr.rel (%p202) target = $region32
      $region31: #{tpu_custom_call.1} parent=5 // pred_region
        // Predicated region
        $region33: #{tpu_custom_call.1} parent=31 // pred_check
          %p205 = pneg %p38
        $region34: #{tpu_custom_call.1} parent=31 // pred_check_branch
          %207 = sbr.rel (%p205) target = $region36
        $region35: #{tpu_custom_call.1} parent=31 // pred_region
          %s208 = sand.u32 %s28, 1
          %s209 = scalar_lea.sflag [#allocation3], %s208
          %s210 = sand.u32 %s28, 1
          %s211 = smul.addr %s210, 512
          %s212 = scalar_lea.vmem [#allocation2], %s211
          %s213 = smul.u32 32, %s18
          %s215 = ssub.s32 8192, 8192
          %216 = vsyncadd %s209, %s215
          %s217 = smul.addr %s213, 2
          %s218 = smul.addr %s217, 128
          %s219 = scalar_lea.hbm %s0, %s218
          %s220 = sshll.u32 %s212, 4
          %s221 = int_to_ptr.vmem [resolvable:$true] %s220
          %226 = dma.hbm_to_vmem [thread:$0]  %s219, 8192, %s221, %s209, 256, 256, 16
        $region36: #{tpu_custom_call.1} parent=31 // pred_fallthru
          _
      $region32: #{tpu_custom_call.1} parent=5 // pred_fallthru
        _
      %p227 = scmp.le.s32.totalorder 1, %s18
      %p228 = scmp.lt.s32.totalorder %s18, 3
      %p229 = pnand %p227, %p228
      %p230 = pneg %p229
      // Predicated region
      $region37: #{tpu_custom_call.1} parent=5 // pred_check
        _
      $region38: #{tpu_custom_call.1} parent=5 // pred_check_branch
        %232 = sbr.rel (%p229) target = $region40
      $region39: #{tpu_custom_call.1} parent=5 // pred_region
        %s233 = ssub.s32 %s18, 1
        %s234 = sand.u32 %s31, 1
        %s235 = scalar_lea.sflag [#allocation3], %s234
        %s236 = sand.u32 %s31, 1
        %s237 = smul.addr %s236, 512
        %s238 = scalar_lea.vmem [#allocation2], %s237
        // Predicated region
        $region41: #{tpu_custom_call.1} parent=39 // pred_check
          %p239 = pneg %p44
        $region42: #{tpu_custom_call.1} parent=39 // pred_check_branch
          %241 = sbr.rel (%p239) target = $region44
        $region43: #{tpu_custom_call.1} parent=39 // pred_region
          %242 = dma.done %s235, 8192
        $region44: #{tpu_custom_call.1} parent=39 // pred_fallthru
          _
        // Predicated region
        $region45: #{tpu_custom_call.1} parent=39 // pred_check
          %p243 = pneg %p65
        $region46: #{tpu_custom_call.1} parent=39 // pred_check_branch
          %245 = sbr.rel (%p243) target = $region48
        $region47: #{tpu_custom_call.1} parent=39 // pred_region
          %246 = dma.done [#allocation6], 2048
        $region48: #{tpu_custom_call.1} parent=39 // pred_fallthru
          _
        // Predicated region
        $region49: #{tpu_custom_call.1} parent=39 // pred_check
          %p247 = pneg %p107
        $region50: #{tpu_custom_call.1} parent=39 // pred_check_branch
          %249 = sbr.rel (%p247) target = $region52
        $region51: #{tpu_custom_call.1} parent=39 // pred_region
          %250 = dma.done [#allocation6], 1024
        $region52: #{tpu_custom_call.1} parent=39 // pred_fallthru
          _
        %s251 = sand.u32 %s31, 1
        %s252 = scalar_lea.sflag [#allocation3], %s251
        %s253 = sand.u32 %s31, 1
        %s254 = smul.addr %s253, 512
        %s255 = scalar_lea.vmem [#allocation2], %s254
        %p256 = pneg %p44
        %p257 = pneg %p41
        %p258 = pneg %p65
        %p259 = pneg %p62
        %p260 = pneg %p86
        %p261 = pneg %p83
        %p262 = pneg %p107
        %p263 = pneg %p104
        %p264 = pneg %p128
        %p265 = pneg %p125
        %p266 = pneg %p154
        %p267 = pneg %p151
        %s268 = sand.u32 %s141, 1
        %s269 = scalar_lea.sflag [#allocation4], %s268
        %s270 = sand.u32 %s141, 1
        %s271 = smul.addr %s270, 256
        %s272 = scalar_lea.vmem [#allocation8], %s271
        %s273 = smul.u32 32, %s23
        %s274 = smul.u32 32, %s23
        %v276 = vld [vmem:[%s238] sm:$0xff]
        %v277 = vld [vmem:[%s238 + $0x8] sm:$0xff]
        %v278 = vld [vmem:[%s238 + $0x10] sm:$0xff]
        %v279 = vld [vmem:[%s238 + $0x18] sm:$0xff]
        %v280 = vld [vmem:[%s238 + $0x20] sm:$0xff]
        %v281 = vld [vmem:[%s238 + $0x28] sm:$0xff]
        %v282 = vld [vmem:[%s238 + $0x30] sm:$0xff]
        %v283 = vld [vmem:[%s238 + $0x38] sm:$0xff]
        %v284 = vld [vmem:[%s238 + $0x40] sm:$0xff]
        %v285 = vld [vmem:[%s238 + $0x48] sm:$0xff]
        %v286 = vld [vmem:[%s238 + $0x50] sm:$0xff]
        %v287 = vld [vmem:[%s238 + $0x58] sm:$0xff]
        %v288 = vld [vmem:[%s238 + $0x60] sm:$0xff]
        %v289 = vld [vmem:[%s238 + $0x68] sm:$0xff]
        %v290 = vld [vmem:[%s238 + $0x70] sm:$0xff]
        %v291 = vld [vmem:[%s238 + $0x78] sm:$0xff]
        %v292 = vld [vmem:[%s238 + $0x80] sm:$0xff]
        %v293 = vld [vmem:[%s238 + $0x88] sm:$0xff]
        %v294 = vld [vmem:[%s238 + $0x90] sm:$0xff]
        %v295 = vld [vmem:[%s238 + $0x98] sm:$0xff]
        %v296 = vld [vmem:[%s238 + $0xa0] sm:$0xff]
        %v297 = vld [vmem:[%s238 + $0xa8] sm:$0xff]
        %v298 = vld [vmem:[%s238 + $0xb0] sm:$0xff]
        %v299 = vld [vmem:[%s238 + $0xb8] sm:$0xff]
        %v300 = vld [vmem:[%s238 + $0xc0] sm:$0xff]
        %v301 = vld [vmem:[%s238 + $0xc8] sm:$0xff]
        %v302 = vld [vmem:[%s238 + $0xd0] sm:$0xff]
        %v303 = vld [vmem:[%s238 + $0xd8] sm:$0xff]
        %v304 = vld [vmem:[%s238 + $0xe0] sm:$0xff]
        %v305 = vld [vmem:[%s238 + $0xe8] sm:$0xff]
        %v306 = vld [vmem:[%s238 + $0xf0] sm:$0xff]
        %v307 = vld [vmem:[%s238 + $0xf8] sm:$0xff]
        %v308 = vld [vmem:[%s238 + $0x100] sm:$0xff]
        %v309 = vld [vmem:[%s238 + $0x108] sm:$0xff]
        %v310 = vld [vmem:[%s238 + $0x110] sm:$0xff]
        %v311 = vld [vmem:[%s238 + $0x118] sm:$0xff]
        %v312 = vld [vmem:[%s238 + $0x120] sm:$0xff]
        %v313 = vld [vmem:[%s238 + $0x128] sm:$0xff]
        %v314 = vld [vmem:[%s238 + $0x130] sm:$0xff]
        %v315 = vld [vmem:[%s238 + $0x138] sm:$0xff]
        %v316 = vld [vmem:[%s238 + $0x140] sm:$0xff]
        %v317 = vld [vmem:[%s238 + $0x148] sm:$0xff]
        %v318 = vld [vmem:[%s238 + $0x150] sm:$0xff]
        %v319 = vld [vmem:[%s238 + $0x158] sm:$0xff]
        %v320 = vld [vmem:[%s238 + $0x160] sm:$0xff]
        %v321 = vld [vmem:[%s238 + $0x168] sm:$0xff]
        %v322 = vld [vmem:[%s238 + $0x170] sm:$0xff]
        %v323 = vld [vmem:[%s238 + $0x178] sm:$0xff]
        %v324 = vld [vmem:[%s238 + $0x180] sm:$0xff]
        %v325 = vld [vmem:[%s238 + $0x188] sm:$0xff]
        %v326 = vld [vmem:[%s238 + $0x190] sm:$0xff]
        %v327 = vld [vmem:[%s238 + $0x198] sm:$0xff]
        %v328 = vld [vmem:[%s238 + $0x1a0] sm:$0xff]
        %v329 = vld [vmem:[%s238 + $0x1a8] sm:$0xff]
        %v330 = vld [vmem:[%s238 + $0x1b0] sm:$0xff]
        %v331 = vld [vmem:[%s238 + $0x1b8] sm:$0xff]
        %v332 = vld [vmem:[%s238 + $0x1c0] sm:$0xff]
        %v333 = vld [vmem:[%s238 + $0x1c8] sm:$0xff]
        %v334 = vld [vmem:[%s238 + $0x1d0] sm:$0xff]
        %v335 = vld [vmem:[%s238 + $0x1d8] sm:$0xff]
        %v336 = vld [vmem:[%s238 + $0x1e0] sm:$0xff]
        %v337 = vld [vmem:[%s238 + $0x1e8] sm:$0xff]
        %v338 = vld [vmem:[%s238 + $0x1f0] sm:$0xff]
        %v339 = vld [vmem:[%s238 + $0x1f8] sm:$0xff]
        %v340 = vpack.c.bf16 %v278, %v276
        %v341 = vpack.c.bf16 %v279, %v277
        %v342 = vpack.c.bf16 %v282, %v280
        %v343 = vpack.c.bf16 %v283, %v281
        %v344 = vpack.c.bf16 %v286, %v284
        %v345 = vpack.c.bf16 %v287, %v285
        %v346 = vpack.c.bf16 %v290, %v288
        %v347 = vpack.c.bf16 %v291, %v289
        %v348 = vpack.c.bf16 %v294, %v292
        %v349 = vpack.c.bf16 %v295, %v293
        %v350 = vpack.c.bf16 %v298, %v296
        %v351 = vpack.c.bf16 %v299, %v297
        %v352 = vpack.c.bf16 %v302, %v300
        %v353 = vpack.c.bf16 %v303, %v301
        %v354 = vpack.c.bf16 %v306, %v304
        %v355 = vpack.c.bf16 %v307, %v305
        %v356 = vpack.c.bf16 %v310, %v308
        %v357 = vpack.c.bf16 %v311, %v309
        %v358 = vpack.c.bf16 %v314, %v312
        %v359 = vpack.c.bf16 %v315, %v313
        %v360 = vpack.c.bf16 %v318, %v316
        %v361 = vpack.c.bf16 %v319, %v317
        %v362 = vpack.c.bf16 %v322, %v320
        %v363 = vpack.c.bf16 %v323, %v321
        %v364 = vpack.c.bf16 %v326, %v324
        %v365 = vpack.c.bf16 %v327, %v325
        %v366 = vpack.c.bf16 %v330, %v328
        %v367 = vpack.c.bf16 %v331, %v329
        %v368 = vpack.c.bf16 %v334, %v332
        %v369 = vpack.c.bf16 %v335, %v333
        %v370 = vpack.c.bf16 %v338, %v336
        %v371 = vpack.c.bf16 %v339, %v337
        %v372 = vld [vmem:[#allocation5] sm:$0xf]
        %v373 = vld [vmem:[#allocation5 + $0x4] sm:$0xf]
        %v374 = vld [vmem:[#allocation5 + $0x8] sm:$0xf]
        %v375 = vld [vmem:[#allocation5 + $0xc] sm:$0xf]
        %v376 = vld [vmem:[#allocation5 + $0x10] sm:$0xf]
        %v377 = vld [vmem:[#allocation5 + $0x14] sm:$0xf]
        %v378 = vld [vmem:[#allocation5 + $0x18] sm:$0xf]
        %v379 = vld [vmem:[#allocation5 + $0x1c] sm:$0xf]
        %v380 = vld [vmem:[#allocation5 + $0x20] sm:$0xf]
        %v381 = vld [vmem:[#allocation5 + $0x24] sm:$0xf]
        %v382 = vld [vmem:[#allocation5 + $0x28] sm:$0xf]
        %v383 = vld [vmem:[#allocation5 + $0x2c] sm:$0xf]
        %v384 = vld [vmem:[#allocation5 + $0x30] sm:$0xf]
        %v385 = vld [vmem:[#allocation5 + $0x34] sm:$0xf]
        %v386 = vld [vmem:[#allocation5 + $0x38] sm:$0xf]
        %v387 = vld [vmem:[#allocation5 + $0x3c] sm:$0xf]
        %v388 = vld [vmem:[#allocation5 + $0x40] sm:$0xf]
        %v389 = vld [vmem:[#allocation5 + $0x44] sm:$0xf]
        %v390 = vld [vmem:[#allocation5 + $0x48] sm:$0xf]
        %v391 = vld [vmem:[#allocation5 + $0x4c] sm:$0xf]
        %v392 = vld [vmem:[#allocation5 + $0x50] sm:$0xf]
        %v393 = vld [vmem:[#allocation5 + $0x54] sm:$0xf]
        %v394 = vld [vmem:[#allocation5 + $0x58] sm:$0xf]
        %v395 = vld [vmem:[#allocation5 + $0x5c] sm:$0xf]
        %v396 = vld [vmem:[#allocation5 + $0x60] sm:$0xf]
        %v397 = vld [vmem:[#allocation5 + $0x64] sm:$0xf]
        %v398 = vld [vmem:[#allocation5 + $0x68] sm:$0xf]
        %v399 = vld [vmem:[#allocation5 + $0x6c] sm:$0xf]
        %v400 = vld [vmem:[#allocation5 + $0x70] sm:$0xf]
        %v401 = vld [vmem:[#allocation5 + $0x74] sm:$0xf]
        %v402 = vld [vmem:[#allocation5 + $0x78] sm:$0xf]
        %v403 = vld [vmem:[#allocation5 + $0x7c] sm:$0xf]
        %v404 = vld [vmem:[%s2] sm:$0x1]
        %v406 = vlaneseq
        %v407 = vshrl.u32 %v406, 7
        %v408 = vsub.s32 0, %v407
        %v409 = vrot.slane %v404, %v408
        %v443 = vunpack.c.l.b16 %v372
        %v444 = vunpack.c.l.b16 %v373
        %v445 = vunpack.c.l.b16 %v374
        %v446 = vunpack.c.l.b16 %v375
        %v447 = vunpack.c.l.b16 %v376
        %v448 = vunpack.c.l.b16 %v377
        %v449 = vunpack.c.l.b16 %v378
        %v450 = vunpack.c.l.b16 %v379
        %v451 = vunpack.c.l.b16 %v380
        %v452 = vunpack.c.l.b16 %v381
        %v453 = vunpack.c.l.b16 %v382
        %v454 = vunpack.c.l.b16 %v383
        %v455 = vunpack.c.l.b16 %v384
        %v456 = vunpack.c.l.b16 %v385
        %v457 = vunpack.c.l.b16 %v386
        %v458 = vunpack.c.l.b16 %v387
        %v459 = vunpack.c.l.b16 %v388
        %v460 = vunpack.c.l.b16 %v389
        %v461 = vunpack.c.l.b16 %v390
        %v462 = vunpack.c.l.b16 %v391
        %v463 = vunpack.c.l.b16 %v392
        %v464 = vunpack.c.l.b16 %v393
        %v465 = vunpack.c.l.b16 %v394
        %v466 = vunpack.c.l.b16 %v395
        %v467 = vunpack.c.l.b16 %v396
        %v468 = vunpack.c.l.b16 %v397
        %v469 = vunpack.c.l.b16 %v398
        %v470 = vunpack.c.l.b16 %v399
        %v471 = vunpack.c.l.b16 %v400
        %v472 = vunpack.c.l.b16 %v401
        %v473 = vunpack.c.l.b16 %v402
        %v474 = vunpack.c.l.b16 %v403
        %v475 = vpack.c.b16 %v444, %v443
        %v476 = vpack.c.b16 %v446, %v445
        %v477 = vpack.c.b16 %v448, %v447
        %v478 = vpack.c.b16 %v450, %v449
        %v479 = vpack.c.b16 %v452, %v451
        %v480 = vpack.c.b16 %v454, %v453
        %v481 = vpack.c.b16 %v456, %v455
        %v482 = vpack.c.b16 %v458, %v457
        %v483 = vpack.c.b16 %v460, %v459
        %v484 = vpack.c.b16 %v462, %v461
        %v485 = vpack.c.b16 %v464, %v463
        %v486 = vpack.c.b16 %v466, %v465
        %v487 = vpack.c.b16 %v468, %v467
        %v488 = vpack.c.b16 %v470, %v469
        %v489 = vpack.c.b16 %v472, %v471
        %v490 = vpack.c.b16 %v474, %v473
        %507 = vmatprep.subr.bf16.mxu0 0
        %508 = vmatpush1.bf16.msra.mxu0 %v475
        %509 = vmatprep.subr.bf16.mxu0 0
        %510 = vmatpush1.bf16.msra.mxu0 %v476
        %511 = vmatprep.subr.bf16.mxu0 0
        %512 = vmatpush1.bf16.msra.mxu0 %v477
        %513 = vmatprep.subr.bf16.mxu0 0
        %514 = vmatpush1.bf16.msra.mxu0 %v478
        %515 = vmatprep.subr.bf16.mxu0 0
        %516 = vmatpush1.bf16.msra.mxu0 %v479
        %517 = vmatprep.subr.bf16.mxu0 0
        %518 = vmatpush1.bf16.msra.mxu0 %v480
        %519 = vmatprep.subr.bf16.mxu0 0
        %520 = vmatpush1.bf16.msra.mxu0 %v481
        %521 = vmatprep.subr.bf16.mxu0 0
        %522 = vmatpush1.bf16.msra.mxu0 %v482
        %523 = vmatprep.subr.bf16.mxu0 0
        %524 = vmatpush1.bf16.msra.mxu0 %v483
        %525 = vmatprep.subr.bf16.mxu0 0
        %526 = vmatpush1.bf16.msra.mxu0 %v484
        %527 = vmatprep.subr.bf16.mxu0 0
        %528 = vmatpush1.bf16.msra.mxu0 %v485
        %529 = vmatprep.subr.bf16.mxu0 0
        %530 = vmatpush1.bf16.msra.mxu0 %v486
        %531 = vmatprep.subr.bf16.mxu0 0
        %532 = vmatpush1.bf16.msra.mxu0 %v487
        %533 = vmatprep.subr.bf16.mxu0 0
        %534 = vmatpush1.bf16.msra.mxu0 %v488
        %535 = vmatprep.subr.bf16.mxu0 0
        %536 = vmatpush1.bf16.msra.mxu0 %v489
        %537 = vmatprep.subr.bf16.mxu0 0
        %538 = vmatpush1.bf16.msra.mxu0 %v490
        %539 = vmatprep.mubr.bf16.mxu0 %v341
        %540 = vmatmul.mubr.bf16.gmra.mrb[0].mxu0 %v340
        %v541 = vpop.f32.mrb[0].mxu0
        %v542 = vadd.f32 %v409, %v541
        %v543 = vpop.f32.mrb[0].mxu0
        %v544 = vpop.f32.mrb[0].mxu0
        %v545 = vadd.f32 %v409, %v544
        %v546 = vpop.f32.mrb[0].mxu0
        %547 = vmatprep.mubr.bf16.mxu0 %v343
        %548 = vmatmul.mubr.bf16.gmra.mrb[0].mxu0 %v342
        %v549 = vpop.f32.mrb[0].mxu0
        %v550 = vadd.f32 %v409, %v549
        %v551 = vpop.f32.mrb[0].mxu0
        %v552 = vpop.f32.mrb[0].mxu0
        %v553 = vadd.f32 %v409, %v552
        %v554 = vpop.f32.mrb[0].mxu0
        %555 = vmatprep.mubr.bf16.mxu0 %v345
        %556 = vmatmul.mubr.bf16.gmra.mrb[0].mxu0 %v344
        %v557 = vpop.f32.mrb[0].mxu0
        %v558 = vadd.f32 %v409, %v557
        %v559 = vpop.f32.mrb[0].mxu0
        %v560 = vpop.f32.mrb[0].mxu0
        %v561 = vadd.f32 %v409, %v560
        %v562 = vpop.f32.mrb[0].mxu0
        %563 = vmatprep.mubr.bf16.mxu0 %v347
        %564 = vmatmul.mubr.bf16.gmra.mrb[0].mxu0 %v346
        %v565 = vpop.f32.mrb[0].mxu0
        %v566 = vadd.f32 %v409, %v565
        %v567 = vpop.f32.mrb[0].mxu0
        %v568 = vpop.f32.mrb[0].mxu0
        %v569 = vadd.f32 %v409, %v568
        %v570 = vpop.f32.mrb[0].mxu0
        %571 = vmatprep.mubr.bf16.mxu0 %v349
        %572 = vmatmul.mubr.bf16.gmra.mrb[0].mxu0 %v348
        %v573 = vpop.f32.mrb[0].mxu0
        %v574 = vadd.f32 %v409, %v573
        %v575 = vpop.f32.mrb[0].mxu0
        %v576 = vpop.f32.mrb[0].mxu0
        %v577 = vadd.f32 %v409, %v576
        %v578 = vpop.f32.mrb[0].mxu0
        %579 = vmatprep.mubr.bf16.mxu0 %v351
        %580 = vmatmul.mubr.bf16.gmra.mrb[0].mxu0 %v350
        %v581 = vpop.f32.mrb[0].mxu0
        %v582 = vadd.f32 %v409, %v581
        %v583 = vpop.f32.mrb[0].mxu0
        %v584 = vpop.f32.mrb[0].mxu0
        %v585 = vadd.f32 %v409, %v584
        %v586 = vpop.f32.mrb[0].mxu0
        %587 = vmatprep.mubr.bf16.mxu0 %v353
        %588 = vmatmul.mubr.bf16.gmra.mrb[0].mxu0 %v352
        %v589 = vpop.f32.mrb[0].mxu0
        %v590 = vadd.f32 %v409, %v589
        %v591 = vpop.f32.mrb[0].mxu0
        %v592 = vpop.f32.mrb[0].mxu0
        %v593 = vadd.f32 %v409, %v592
        %v594 = vpop.f32.mrb[0].mxu0
        %595 = vmatprep.mubr.bf16.mxu0 %v355
        %596 = vmatmul.mubr.bf16.gmra.mrb[0].mxu0 %v354
        %v597 = vpop.f32.mrb[0].mxu0
        %v598 = vadd.f32 %v409, %v597
        %v599 = vpop.f32.mrb[0].mxu0
        %v600 = vpop.f32.mrb[0].mxu0
        %v601 = vadd.f32 %v409, %v600
        %v602 = vpop.f32.mrb[0].mxu0
        %603 = vmatprep.mubr.bf16.mxu0 %v357
        %604 = vmatmul.mubr.bf16.gmra.mrb[0].mxu0 %v356
        %v605 = vpop.f32.mrb[0].mxu0
        %v606 = vadd.f32 %v409, %v605
        %v607 = vpop.f32.mrb[0].mxu0
        %v608 = vpop.f32.mrb[0].mxu0
        %v609 = vadd.f32 %v409, %v608
        %v610 = vpop.f32.mrb[0].mxu0
        %611 = vmatprep.mubr.bf16.mxu0 %v359
        %612 = vmatmul.mubr.bf16.gmra.mrb[0].mxu0 %v358
        %v613 = vpop.f32.mrb[0].mxu0
        %v614 = vadd.f32 %v409, %v613
        %v615 = vpop.f32.mrb[0].mxu0
        %v616 = vpop.f32.mrb[0].mxu0
        %v617 = vadd.f32 %v409, %v616
        %v618 = vpop.f32.mrb[0].mxu0
        %619 = vmatprep.mubr.bf16.mxu0 %v361
        %620 = vmatmul.mubr.bf16.gmra.mrb[0].mxu0 %v360
        %v621 = vpop.f32.mrb[0].mxu0
        %v622 = vadd.f32 %v409, %v621
        %v623 = vpop.f32.mrb[0].mxu0
        %v624 = vpop.f32.mrb[0].mxu0
        %v625 = vadd.f32 %v409, %v624
        %v626 = vpop.f32.mrb[0].mxu0
        %627 = vmatprep.mubr.bf16.mxu0 %v363
        %628 = vmatmul.mubr.bf16.gmra.mrb[0].mxu0 %v362
        %v629 = vpop.f32.mrb[0].mxu0
        %v630 = vadd.f32 %v409, %v629
        %v631 = vpop.f32.mrb[0].mxu0
        %v632 = vpop.f32.mrb[0].mxu0
        %v633 = vadd.f32 %v409, %v632
        %v634 = vpop.f32.mrb[0].mxu0
        %635 = vmatprep.mubr.bf16.mxu0 %v365
        %636 = vmatmul.mubr.bf16.gmra.mrb[0].mxu0 %v364
        %v637 = vpop.f32.mrb[0].mxu0
        %v638 = vadd.f32 %v409, %v637
        %v639 = vpop.f32.mrb[0].mxu0
        %v640 = vpop.f32.mrb[0].mxu0
        %v641 = vadd.f32 %v409, %v640
        %v642 = vpop.f32.mrb[0].mxu0
        %643 = vmatprep.mubr.bf16.mxu0 %v367
        %644 = vmatmul.mubr.bf16.gmra.mrb[0].mxu0 %v366
        %v645 = vpop.f32.mrb[0].mxu0
        %v646 = vadd.f32 %v409, %v645
        %v647 = vpop.f32.mrb[0].mxu0
        %v648 = vpop.f32.mrb[0].mxu0
        %v649 = vadd.f32 %v409, %v648
        %v650 = vpop.f32.mrb[0].mxu0
        %651 = vmatprep.mubr.bf16.mxu0 %v369
        %652 = vmatmul.mubr.bf16.gmra.mrb[0].mxu0 %v368
        %v653 = vpop.f32.mrb[0].mxu0
        %v654 = vadd.f32 %v409, %v653
        %v655 = vpop.f32.mrb[0].mxu0
        %v656 = vpop.f32.mrb[0].mxu0
        %v657 = vadd.f32 %v409, %v656
        %v658 = vpop.f32.mrb[0].mxu0
        %659 = vmatprep.mubr.bf16.mxu0 %v371
        %660 = vmatmul.mubr.bf16.gmra.mrb[0].mxu0 %v370
        %v661 = vpop.f32.mrb[0].mxu0
        %v662 = vadd.f32 %v409, %v661
        %v663 = vpop.f32.mrb[0].mxu0
        %v664 = vpop.f32.mrb[0].mxu0
        %v665 = vadd.f32 %v409, %v664
        %v666 = vpop.f32.mrb[0].mxu0
        %667 = vdwg.mxu0
        %v668 = vmax.f32 %v542, 0.0
        %v669 = vmax.f32 %v545, 0.0
        %v670 = vmax.f32 %v550, 0.0
        %v671 = vmax.f32 %v553, 0.0
        %v672 = vmax.f32 %v558, 0.0
        %v673 = vmax.f32 %v561, 0.0
        %v674 = vmax.f32 %v566, 0.0
        %v675 = vmax.f32 %v569, 0.0
        %v676 = vmax.f32 %v574, 0.0
        %v677 = vmax.f32 %v577, 0.0
        %v678 = vmax.f32 %v582, 0.0
        %v679 = vmax.f32 %v585, 0.0
        %v680 = vmax.f32 %v590, 0.0
        %v681 = vmax.f32 %v593, 0.0
        %v682 = vmax.f32 %v598, 0.0
        %v683 = vmax.f32 %v601, 0.0
        %v684 = vmax.f32 %v606, 0.0
        %v685 = vmax.f32 %v609, 0.0
        %v686 = vmax.f32 %v614, 0.0
        %v687 = vmax.f32 %v617, 0.0
        %v688 = vmax.f32 %v622, 0.0
        %v689 = vmax.f32 %v625, 0.0
        %v690 = vmax.f32 %v630, 0.0
        %v691 = vmax.f32 %v633, 0.0
        %v692 = vmax.f32 %v638, 0.0
        %v693 = vmax.f32 %v641, 0.0
        %v694 = vmax.f32 %v646, 0.0
        %v695 = vmax.f32 %v649, 0.0
        %v696 = vmax.f32 %v654, 0.0
        %v697 = vmax.f32 %v657, 0.0
        %v698 = vmax.f32 %v662, 0.0
        %v699 = vmax.f32 %v665, 0.0
        %v700 = vpack.c.bf16 %v669, %v668
        %v701 = vpack.c.bf16 %v671, %v670
        %v702 = vpack.c.bf16 %v673, %v672
        %v703 = vpack.c.bf16 %v675, %v674
        %v704 = vpack.c.bf16 %v677, %v676
        %v705 = vpack.c.bf16 %v679, %v678
        %v706 = vpack.c.bf16 %v681, %v680
        %v707 = vpack.c.bf16 %v683, %v682
        %v708 = vpack.c.bf16 %v685, %v684
        %v709 = vpack.c.bf16 %v687, %v686
        %v710 = vpack.c.bf16 %v689, %v688
        %v711 = vpack.c.bf16 %v691, %v690
        %v712 = vpack.c.bf16 %v693, %v692
        %v713 = vpack.c.bf16 %v695, %v694
        %v714 = vpack.c.bf16 %v697, %v696
        %v715 = vpack.c.bf16 %v699, %v698
        %v716 = vld [vmem:[#allocation7] sm:$0xf]
        %v717 = vld [vmem:[#allocation7 + $0x4] sm:$0xf]
        %v718 = vld [vmem:[#allocation7 + $0x8] sm:$0xf]
        %v719 = vld [vmem:[#allocation7 + $0xc] sm:$0xf]
        %v720 = vld [vmem:[#allocation7 + $0x10] sm:$0xf]
        %v721 = vld [vmem:[#allocation7 + $0x14] sm:$0xf]
        %v722 = vld [vmem:[#allocation7 + $0x18] sm:$0xf]
        %v723 = vld [vmem:[#allocation7 + $0x1c] sm:$0xf]
        %v724 = vld [vmem:[#allocation7 + $0x20] sm:$0xf]
        %v725 = vld [vmem:[#allocation7 + $0x24] sm:$0xf]
        %v726 = vld [vmem:[#allocation7 + $0x28] sm:$0xf]
        %v727 = vld [vmem:[#allocation7 + $0x2c] sm:$0xf]
        %v728 = vld [vmem:[#allocation7 + $0x30] sm:$0xf]
        %v729 = vld [vmem:[#allocation7 + $0x34] sm:$0xf]
        %v730 = vld [vmem:[#allocation7 + $0x38] sm:$0xf]
        %v731 = vld [vmem:[#allocation7 + $0x3c] sm:$0xf]
        %v732 = vld [vmem:[%s4] sm:$0x1]
        %v734 = vlaneseq
        %v735 = vshrl.u32 %v734, 7
        %v736 = vsub.s32 0, %v735
        %v737 = vrot.slane %v732, %v736
        %v755 = vunpack.c.l.b16 %v716
        %v756 = vunpack.c.l.b16 %v717
        %v757 = vunpack.c.l.b16 %v718
        %v758 = vunpack.c.l.b16 %v719
        %v759 = vunpack.c.l.b16 %v720
        %v760 = vunpack.c.l.b16 %v721
        %v761 = vunpack.c.l.b16 %v722
        %v762 = vunpack.c.l.b16 %v723
        %v763 = vunpack.c.l.b16 %v724
        %v764 = vunpack.c.l.b16 %v725
        %v765 = vunpack.c.l.b16 %v726
        %v766 = vunpack.c.l.b16 %v727
        %v767 = vunpack.c.l.b16 %v728
        %v768 = vunpack.c.l.b16 %v729
        %v769 = vunpack.c.l.b16 %v730
        %v770 = vunpack.c.l.b16 %v731
        %v771 = vpack.c.b16 %v756, %v755
        %v772 = vpack.c.b16 %v758, %v757
        %v773 = vpack.c.b16 %v760, %v759
        %v774 = vpack.c.b16 %v762, %v761
        %v775 = vpack.c.b16 %v764, %v763
        %v776 = vpack.c.b16 %v766, %v765
        %v777 = vpack.c.b16 %v768, %v767
        %v778 = vpack.c.b16 %v770, %v769
        %787 = vmatprep.subr.bf16.mxu0 0
        %788 = vmatpush1.bf16.msra.mxu0 %v771
        %789 = vmatprep.subr.bf16.mxu0 0
        %790 = vmatpush1.bf16.msra.mxu0 %v772
        %791 = vmatprep.subr.bf16.mxu0 0
        %792 = vmatpush1.bf16.msra.mxu0 %v773
        %793 = vmatprep.subr.bf16.mxu0 0
        %794 = vmatpush1.bf16.msra.mxu0 %v774
        %795 = vmatprep.subr.bf16.mxu0 0
        %796 = vmatpush1.bf16.msra.mxu0 %v775
        %797 = vmatprep.subr.bf16.mxu0 0
        %798 = vmatpush1.bf16.msra.mxu0 %v776
        %799 = vmatprep.subr.bf16.mxu0 0
        %800 = vmatpush1.bf16.msra.mxu0 %v777
        %801 = vmatprep.subr.bf16.mxu0 0
        %802 = vmatpush1.bf16.msra.mxu0 %v778
        %803 = vmatprep.subr.bf16.mxu0 0
        %804 = vmatpush1.bf16.msra.mxu0 0
        %805 = vmatprep.subr.bf16.mxu0 0
        %806 = vmatpush1.bf16.msra.mxu0 0
        %807 = vmatprep.subr.bf16.mxu0 0
        %808 = vmatpush1.bf16.msra.mxu0 0
        %809 = vmatprep.subr.bf16.mxu0 0
        %810 = vmatpush1.bf16.msra.mxu0 0
        %811 = vmatprep.subr.bf16.mxu0 0
        %812 = vmatpush1.bf16.msra.mxu0 0
        %813 = vmatprep.subr.bf16.mxu0 0
        %814 = vmatpush1.bf16.msra.mxu0 0
        %815 = vmatprep.subr.bf16.mxu0 0
        %816 = vmatpush1.bf16.msra.mxu0 0
        %817 = vmatprep.subr.bf16.mxu0 0
        %818 = vmatpush1.bf16.msra.mxu0 0
        %819 = vmatprep.mubr.bf16.mxu0 0
        %820 = vmatmul.mubr.bf16.gmra.mrb[0].mxu0 %v700
        %v821 = vpop.f32.mrb[0].mxu0
        %v822 = vadd.f32 %v737, %v821
        %v823 = vpop.f32.mrb[0].mxu0
        %v824 = vpop.f32.mrb[0].mxu0
        %v825 = vadd.f32 %v737, %v824
        %v826 = vpop.f32.mrb[0].mxu0
        %827 = vmatprep.mubr.bf16.mxu0 0
        %828 = vmatmul.mubr.bf16.gmra.mrb[0].mxu0 %v701
        %v829 = vpop.f32.mrb[0].mxu0
        %v830 = vadd.f32 %v737, %v829
        %v831 = vpop.f32.mrb[0].mxu0
        %v832 = vpop.f32.mrb[0].mxu0
        %v833 = vadd.f32 %v737, %v832
        %v834 = vpop.f32.mrb[0].mxu0
        %835 = vmatprep.mubr.bf16.mxu0 0
        %836 = vmatmul.mubr.bf16.gmra.mrb[0].mxu0 %v702
        %v837 = vpop.f32.mrb[0].mxu0
        %v838 = vadd.f32 %v737, %v837
        %v839 = vpop.f32.mrb[0].mxu0
        %v840 = vpop.f32.mrb[0].mxu0
        %v841 = vadd.f32 %v737, %v840
        %v842 = vpop.f32.mrb[0].mxu0
        %843 = vmatprep.mubr.bf16.mxu0 0
        %844 = vmatmul.mubr.bf16.gmra.mrb[0].mxu0 %v703
        %v845 = vpop.f32.mrb[0].mxu0
        %v846 = vadd.f32 %v737, %v845
        %v847 = vpop.f32.mrb[0].mxu0
        %v848 = vpop.f32.mrb[0].mxu0
        %v849 = vadd.f32 %v737, %v848
        %v850 = vpop.f32.mrb[0].mxu0
        %851 = vmatprep.mubr.bf16.mxu0 0
        %852 = vmatmul.mubr.bf16.gmra.mrb[0].mxu0 %v704
        %v853 = vpop.f32.mrb[0].mxu0
        %v854 = vadd.f32 %v737, %v853
        %v855 = vpop.f32.mrb[0].mxu0
        %v856 = vpop.f32.mrb[0].mxu0
        %v857 = vadd.f32 %v737, %v856
        %v858 = vpop.f32.mrb[0].mxu0
        %859 = vmatprep.mubr.bf16.mxu0 0
        %860 = vmatmul.mubr.bf16.gmra.mrb[0].mxu0 %v705
        %v861 = vpop.f32.mrb[0].mxu0
        %v862 = vadd.f32 %v737, %v861
        %v863 = vpop.f32.mrb[0].mxu0
        %v864 = vpop.f32.mrb[0].mxu0
        %v865 = vadd.f32 %v737, %v864
        %v866 = vpop.f32.mrb[0].mxu0
        %867 = vmatprep.mubr.bf16.mxu0 0
        %868 = vmatmul.mubr.bf16.gmra.mrb[0].mxu0 %v706
        %v869 = vpop.f32.mrb[0].mxu0
        %v870 = vadd.f32 %v737, %v869
        %v871 = vpop.f32.mrb[0].mxu0
        %v872 = vpop.f32.mrb[0].mxu0
        %v873 = vadd.f32 %v737, %v872
        %v874 = vpop.f32.mrb[0].mxu0
        %875 = vmatprep.mubr.bf16.mxu0 0
        %876 = vmatmul.mubr.bf16.gmra.mrb[0].mxu0 %v707
        %v877 = vpop.f32.mrb[0].mxu0
        %v878 = vadd.f32 %v737, %v877
        %v879 = vpop.f32.mrb[0].mxu0
        %v880 = vpop.f32.mrb[0].mxu0
        %v881 = vadd.f32 %v737, %v880
        %v882 = vpop.f32.mrb[0].mxu0
        %883 = vmatprep.mubr.bf16.mxu0 0
        %884 = vmatmul.mubr.bf16.gmra.mrb[0].mxu0 %v708
        %v885 = vpop.f32.mrb[0].mxu0
        %v886 = vadd.f32 %v737, %v885
        %v887 = vpop.f32.mrb[0].mxu0
        %v888 = vpop.f32.mrb[0].mxu0
        %v889 = vadd.f32 %v737, %v888
        %v890 = vpop.f32.mrb[0].mxu0
        %891 = vmatprep.mubr.bf16.mxu0 0
        %892 = vmatmul.mubr.bf16.gmra.mrb[0].mxu0 %v709
        %v893 = vpop.f32.mrb[0].mxu0
        %v894 = vadd.f32 %v737, %v893
        %v895 = vpop.f32.mrb[0].mxu0
        %v896 = vpop.f32.mrb[0].mxu0
        %v897 = vadd.f32 %v737, %v896
        %v898 = vpop.f32.mrb[0].mxu0
        %899 = vmatprep.mubr.bf16.mxu0 0
        %900 = vmatmul.mubr.bf16.gmra.mrb[0].mxu0 %v710
        %v901 = vpop.f32.mrb[0].mxu0
        %v902 = vadd.f32 %v737, %v901
        %v903 = vpop.f32.mrb[0].mxu0
        %v904 = vpop.f32.mrb[0].mxu0
        %v905 = vadd.f32 %v737, %v904
        %v906 = vpop.f32.mrb[0].mxu0
        %907 = vmatprep.mubr.bf16.mxu0 0
        %908 = vmatmul.mubr.bf16.gmra.mrb[0].mxu0 %v711
        %v909 = vpop.f32.mrb[0].mxu0
        %v910 = vadd.f32 %v737, %v909
        %v911 = vpop.f32.mrb[0].mxu0
        %v912 = vpop.f32.mrb[0].mxu0
        %v913 = vadd.f32 %v737, %v912
        %v914 = vpop.f32.mrb[0].mxu0
        %915 = vmatprep.mubr.bf16.mxu0 0
        %916 = vmatmul.mubr.bf16.gmra.mrb[0].mxu0 %v712
        %v917 = vpop.f32.mrb[0].mxu0
        %v918 = vadd.f32 %v737, %v917
        %v919 = vpop.f32.mrb[0].mxu0
        %v920 = vpop.f32.mrb[0].mxu0
        %v921 = vadd.f32 %v737, %v920
        %v922 = vpop.f32.mrb[0].mxu0
        %923 = vmatprep.mubr.bf16.mxu0 0
        %924 = vmatmul.mubr.bf16.gmra.mrb[0].mxu0 %v713
        %v925 = vpop.f32.mrb[0].mxu0
        %v926 = vadd.f32 %v737, %v925
        %v927 = vpop.f32.mrb[0].mxu0
        %v928 = vpop.f32.mrb[0].mxu0
        %v929 = vadd.f32 %v737, %v928
        %v930 = vpop.f32.mrb[0].mxu0
        %931 = vmatprep.mubr.bf16.mxu0 0
        %932 = vmatmul.mubr.bf16.gmra.mrb[0].mxu0 %v714
        %v933 = vpop.f32.mrb[0].mxu0
        %v934 = vadd.f32 %v737, %v933
        %v935 = vpop.f32.mrb[0].mxu0
        %v936 = vpop.f32.mrb[0].mxu0
        %v937 = vadd.f32 %v737, %v936
        %v938 = vpop.f32.mrb[0].mxu0
        %939 = vmatprep.mubr.bf16.mxu0 0
        %940 = vmatmul.mubr.bf16.gmra.mrb[0].mxu0 %v715
        %v941 = vpop.f32.mrb[0].mxu0
        %v942 = vadd.f32 %v737, %v941
        %v943 = vpop.f32.mrb[0].mxu0
        %v944 = vpop.f32.mrb[0].mxu0
        %v945 = vadd.f32 %v737, %v944
        %v946 = vpop.f32.mrb[0].mxu0
        %947 = vdwg.mxu0
        %948 = vmax.xlane.f32.xlu0 %v822
        %v949 = vpop.xlane.xlu0 %948
        %950 = vmax.xlane.f32.xlu0 %v825
        %v951 = vpop.xlane.xlu0 %950
        %952 = vmax.xlane.f32.xlu0 %v830
        %v953 = vpop.xlane.xlu0 %952
        %954 = vmax.xlane.f32.xlu0 %v833
        %v955 = vpop.xlane.xlu0 %954
        %956 = vmax.xlane.f32.xlu0 %v838
        %v957 = vpop.xlane.xlu0 %956
        %958 = vmax.xlane.f32.xlu0 %v841
        %v959 = vpop.xlane.xlu0 %958
        %960 = vmax.xlane.f32.xlu0 %v846
        %v961 = vpop.xlane.xlu0 %960
        %962 = vmax.xlane.f32.xlu0 %v849
        %v963 = vpop.xlane.xlu0 %962
        %964 = vmax.xlane.f32.xlu0 %v854
        %v965 = vpop.xlane.xlu0 %964
        %966 = vmax.xlane.f32.xlu0 %v857
        %v967 = vpop.xlane.xlu0 %966
        %968 = vmax.xlane.f32.xlu0 %v862
        %v969 = vpop.xlane.xlu0 %968
        %970 = vmax.xlane.f32.xlu0 %v865
        %v971 = vpop.xlane.xlu0 %970
        %972 = vmax.xlane.f32.xlu0 %v870
        %v973 = vpop.xlane.xlu0 %972
        %974 = vmax.xlane.f32.xlu0 %v873
        %v975 = vpop.xlane.xlu0 %974
        %976 = vmax.xlane.f32.xlu0 %v878
        %v977 = vpop.xlane.xlu0 %976
        %978 = vmax.xlane.f32.xlu0 %v881
        %v979 = vpop.xlane.xlu0 %978
        %980 = vmax.xlane.f32.xlu0 %v886
        %v981 = vpop.xlane.xlu0 %980
        %982 = vmax.xlane.f32.xlu0 %v889
        %v983 = vpop.xlane.xlu0 %982
        %984 = vmax.xlane.f32.xlu0 %v894
        %v985 = vpop.xlane.xlu0 %984
        %986 = vmax.xlane.f32.xlu0 %v897
        %v987 = vpop.xlane.xlu0 %986
        %988 = vmax.xlane.f32.xlu0 %v902
        %v989 = vpop.xlane.xlu0 %988
        %990 = vmax.xlane.f32.xlu0 %v905
        %v991 = vpop.xlane.xlu0 %990
        %992 = vmax.xlane.f32.xlu0 %v910
        %v993 = vpop.xlane.xlu0 %992
        %994 = vmax.xlane.f32.xlu0 %v913
        %v995 = vpop.xlane.xlu0 %994
        %996 = vmax.xlane.f32.xlu0 %v918
        %v997 = vpop.xlane.xlu0 %996
        %998 = vmax.xlane.f32.xlu0 %v921
        %v999 = vpop.xlane.xlu0 %998
        %1000 = vmax.xlane.f32.xlu0 %v926
        %v1001 = vpop.xlane.xlu0 %1000
        %1002 = vmax.xlane.f32.xlu0 %v929
        %v1003 = vpop.xlane.xlu0 %1002
        %1004 = vmax.xlane.f32.xlu0 %v934
        %v1005 = vpop.xlane.xlu0 %1004
        %1006 = vmax.xlane.f32.xlu0 %v937
        %v1007 = vpop.xlane.xlu0 %1006
        %1008 = vmax.xlane.f32.xlu0 %v942
        %v1009 = vpop.xlane.xlu0 %1008
        %1010 = vmax.xlane.f32.xlu0 %v945
        %v1011 = vpop.xlane.xlu0 %1010
        %v1012 = vsub.f32 %v822, %v949
        %v1013 = vsub.f32 %v825, %v951
        %v1014 = vsub.f32 %v830, %v953
        %v1015 = vsub.f32 %v833, %v955
        %v1016 = vsub.f32 %v838, %v957
        %v1017 = vsub.f32 %v841, %v959
        %v1018 = vsub.f32 %v846, %v961
        %v1019 = vsub.f32 %v849, %v963
        %v1020 = vsub.f32 %v854, %v965
        %v1021 = vsub.f32 %v857, %v967
        %v1022 = vsub.f32 %v862, %v969
        %v1023 = vsub.f32 %v865, %v971
        %v1024 = vsub.f32 %v870, %v973
        %v1025 = vsub.f32 %v873, %v975
        %v1026 = vsub.f32 %v878, %v977
        %v1027 = vsub.f32 %v881, %v979
        %v1028 = vsub.f32 %v886, %v981
        %v1029 = vsub.f32 %v889, %v983
        %v1030 = vsub.f32 %v894, %v985
        %v1031 = vsub.f32 %v897, %v987
        %v1032 = vsub.f32 %v902, %v989
        %v1033 = vsub.f32 %v905, %v991
        %v1034 = vsub.f32 %v910, %v993
        %v1035 = vsub.f32 %v913, %v995
        %v1036 = vsub.f32 %v918, %v997
        %v1037 = vsub.f32 %v921, %v999
        %v1038 = vsub.f32 %v926, %v1001
        %v1039 = vsub.f32 %v929, %v1003
        %v1040 = vsub.f32 %v934, %v1005
        %v1041 = vsub.f32 %v937, %v1007
        %v1042 = vsub.f32 %v942, %v1009
        %v1043 = vsub.f32 %v945, %v1011
        %v1044 = vmul.f32 %v1012, 1.442695
        %v1045 = vpow.pop %v1044
        %v1046 = vmul.f32 %v1013, 1.442695
        %v1047 = vpow.pop %v1046
        %v1048 = vmul.f32 %v1014, 1.442695
        %v1049 = vpow.pop %v1048
        %v1050 = vmul.f32 %v1015, 1.442695
        %v1051 = vpow.pop %v1050
        %v1052 = vmul.f32 %v1016, 1.442695
        %v1053 = vpow.pop %v1052
        %v1054 = vmul.f32 %v1017, 1.442695
        %v1055 = vpow.pop %v1054
        %v1056 = vmul.f32 %v1018, 1.442695
        %v1057 = vpow.pop %v1056
        %v1058 = vmul.f32 %v1019, 1.442695
        %v1059 = vpow.pop %v1058
        %v1060 = vmul.f32 %v1020, 1.442695
        %v1061 = vpow.pop %v1060
        %v1062 = vmul.f32 %v1021, 1.442695
        %v1063 = vpow.pop %v1062
        %v1064 = vmul.f32 %v1022, 1.442695
        %v1065 = vpow.pop %v1064
        %v1066 = vmul.f32 %v1023, 1.442695
        %v1067 = vpow.pop %v1066
        %v1068 = vmul.f32 %v1024, 1.442695
        %v1069 = vpow.pop %v1068
        %v1070 = vmul.f32 %v1025, 1.442695
        %v1071 = vpow.pop %v1070
        %v1072 = vmul.f32 %v1026, 1.442695
        %v1073 = vpow.pop %v1072
        %v1074 = vmul.f32 %v1027, 1.442695
        %v1075 = vpow.pop %v1074
        %v1076 = vmul.f32 %v1028, 1.442695
        %v1077 = vpow.pop %v1076
        %v1078 = vmul.f32 %v1029, 1.442695
        %v1079 = vpow.pop %v1078
        %v1080 = vmul.f32 %v1030, 1.442695
        %v1081 = vpow.pop %v1080
        %v1082 = vmul.f32 %v1031, 1.442695
        %v1083 = vpow.pop %v1082
        %v1084 = vmul.f32 %v1032, 1.442695
        %v1085 = vpow.pop %v1084
        %v1086 = vmul.f32 %v1033, 1.442695
        %v1087 = vpow.pop %v1086
        %v1088 = vmul.f32 %v1034, 1.442695
        %v1089 = vpow.pop %v1088
        %v1090 = vmul.f32 %v1035, 1.442695
        %v1091 = vpow.pop %v1090
        %v1092 = vmul.f32 %v1036, 1.442695
        %v1093 = vpow.pop %v1092
        %v1094 = vmul.f32 %v1037, 1.442695
        %v1095 = vpow.pop %v1094
        %v1096 = vmul.f32 %v1038, 1.442695
        %v1097 = vpow.pop %v1096
        %v1098 = vmul.f32 %v1039, 1.442695
        %v1099 = vpow.pop %v1098
        %v1100 = vmul.f32 %v1040, 1.442695
        %v1101 = vpow.pop %v1100
        %v1102 = vmul.f32 %v1041, 1.442695
        %v1103 = vpow.pop %v1102
        %v1104 = vmul.f32 %v1042, 1.442695
        %v1105 = vpow.pop %v1104
        %v1106 = vmul.f32 %v1043, 1.442695
        %v1107 = vpow.pop %v1106
        %1108 = vadd.xlane.f32.xlu0 %v1045
        %v1109 = vpop.xlane.xlu0 %1108
        %1110 = vadd.xlane.f32.xlu0 %v1047
        %v1111 = vpop.xlane.xlu0 %1110
        %1112 = vadd.xlane.f32.xlu0 %v1049
        %v1113 = vpop.xlane.xlu0 %1112
        %1114 = vadd.xlane.f32.xlu0 %v1051
        %v1115 = vpop.xlane.xlu0 %1114
        %1116 = vadd.xlane.f32.xlu0 %v1053
        %v1117 = vpop.xlane.xlu0 %1116
        %1118 = vadd.xlane.f32.xlu0 %v1055
        %v1119 = vpop.xlane.xlu0 %1118
        %1120 = vadd.xlane.f32.xlu0 %v1057
        %v1121 = vpop.xlane.xlu0 %1120
        %1122 = vadd.xlane.f32.xlu0 %v1059
        %v1123 = vpop.xlane.xlu0 %1122
        %1124 = vadd.xlane.f32.xlu0 %v1061
        %v1125 = vpop.xlane.xlu0 %1124
        %1126 = vadd.xlane.f32.xlu0 %v1063
        %v1127 = vpop.xlane.xlu0 %1126
        %1128 = vadd.xlane.f32.xlu0 %v1065
        %v1129 = vpop.xlane.xlu0 %1128
        %1130 = vadd.xlane.f32.xlu0 %v1067
        %v1131 = vpop.xlane.xlu0 %1130
        %1132 = vadd.xlane.f32.xlu0 %v1069
        %v1133 = vpop.xlane.xlu0 %1132
        %1134 = vadd.xlane.f32.xlu0 %v1071
        %v1135 = vpop.xlane.xlu0 %1134
        %1136 = vadd.xlane.f32.xlu0 %v1073
        %v1137 = vpop.xlane.xlu0 %1136
        %1138 = vadd.xlane.f32.xlu0 %v1075
        %v1139 = vpop.xlane.xlu0 %1138
        %1140 = vadd.xlane.f32.xlu0 %v1077
        %v1141 = vpop.xlane.xlu0 %1140
        %1142 = vadd.xlane.f32.xlu0 %v1079
        %v1143 = vpop.xlane.xlu0 %1142
        %1144 = vadd.xlane.f32.xlu0 %v1081
        %v1145 = vpop.xlane.xlu0 %1144
        %1146 = vadd.xlane.f32.xlu0 %v1083
        %v1147 = vpop.xlane.xlu0 %1146
        %1148 = vadd.xlane.f32.xlu0 %v1085
        %v1149 = vpop.xlane.xlu0 %1148
        %1150 = vadd.xlane.f32.xlu0 %v1087
        %v1151 = vpop.xlane.xlu0 %1150
        %1152 = vadd.xlane.f32.xlu0 %v1089
        %v1153 = vpop.xlane.xlu0 %1152
        %1154 = vadd.xlane.f32.xlu0 %v1091
        %v1155 = vpop.xlane.xlu0 %1154
        %1156 = vadd.xlane.f32.xlu0 %v1093
        %v1157 = vpop.xlane.xlu0 %1156
        %1158 = vadd.xlane.f32.xlu0 %v1095
        %v1159 = vpop.xlane.xlu0 %1158
        %1160 = vadd.xlane.f32.xlu0 %v1097
        %v1161 = vpop.xlane.xlu0 %1160
        %1162 = vadd.xlane.f32.xlu0 %v1099
        %v1163 = vpop.xlane.xlu0 %1162
        %1164 = vadd.xlane.f32.xlu0 %v1101
        %v1165 = vpop.xlane.xlu0 %1164
        %1166 = vadd.xlane.f32.xlu0 %v1103
        %v1167 = vpop.xlane.xlu0 %1166
        %1168 = vadd.xlane.f32.xlu0 %v1105
        %v1169 = vpop.xlane.xlu0 %1168
        %1170 = vadd.xlane.f32.xlu0 %v1107
        %v1171 = vpop.xlane.xlu0 %1170
        %v1172 = vlog2.pop %v1109
        %v1173 = vmul.f32 %v1172, 0.6931472
        %v1174 = vlog2.pop %v1111
        %v1175 = vmul.f32 %v1174, 0.6931472
        %v1176 = vlog2.pop %v1113
        %v1177 = vmul.f32 %v1176, 0.6931472
        %v1178 = vlog2.pop %v1115
        %v1179 = vmul.f32 %v1178, 0.6931472
        %v1180 = vlog2.pop %v1117
        %v1181 = vmul.f32 %v1180, 0.6931472
        %v1182 = vlog2.pop %v1119
        %v1183 = vmul.f32 %v1182, 0.6931472
        %v1184 = vlog2.pop %v1121
        %v1185 = vmul.f32 %v1184, 0.6931472
        %v1186 = vlog2.pop %v1123
        %v1187 = vmul.f32 %v1186, 0.6931472
        %v1188 = vlog2.pop %v1125
        %v1189 = vmul.f32 %v1188, 0.6931472
        %v1190 = vlog2.pop %v1127
        %v1191 = vmul.f32 %v1190, 0.6931472
        %v1192 = vlog2.pop %v1129
        %v1193 = vmul.f32 %v1192, 0.6931472
        %v1194 = vlog2.pop %v1131
        %v1195 = vmul.f32 %v1194, 0.6931472
        %v1196 = vlog2.pop %v1133
        %v1197 = vmul.f32 %v1196, 0.6931472
        %v1198 = vlog2.pop %v1135
        %v1199 = vmul.f32 %v1198, 0.6931472
        %v1200 = vlog2.pop %v1137
        %v1201 = vmul.f32 %v1200, 0.6931472
        %v1202 = vlog2.pop %v1139
        %v1203 = vmul.f32 %v1202, 0.6931472
        %v1204 = vlog2.pop %v1141
        %v1205 = vmul.f32 %v1204, 0.6931472
        %v1206 = vlog2.pop %v1143
        %v1207 = vmul.f32 %v1206, 0.6931472
        %v1208 = vlog2.pop %v1145
        %v1209 = vmul.f32 %v1208, 0.6931472
        %v1210 = vlog2.pop %v1147
        %v1211 = vmul.f32 %v1210, 0.6931472
        %v1212 = vlog2.pop %v1149
        %v1213 = vmul.f32 %v1212, 0.6931472
        %v1214 = vlog2.pop %v1151
        %v1215 = vmul.f32 %v1214, 0.6931472
        %v1216 = vlog2.pop %v1153
        %v1217 = vmul.f32 %v1216, 0.6931472
        %v1218 = vlog2.pop %v1155
        %v1219 = vmul.f32 %v1218, 0.6931472
        %v1220 = vlog2.pop %v1157
        %v1221 = vmul.f32 %v1220, 0.6931472
        %v1222 = vlog2.pop %v1159
        %v1223 = vmul.f32 %v1222, 0.6931472
        %v1224 = vlog2.pop %v1161
        %v1225 = vmul.f32 %v1224, 0.6931472
        %v1226 = vlog2.pop %v1163
        %v1227 = vmul.f32 %v1226, 0.6931472
        %v1228 = vlog2.pop %v1165
        %v1229 = vmul.f32 %v1228, 0.6931472
        %v1230 = vlog2.pop %v1167
        %v1231 = vmul.f32 %v1230, 0.6931472
        %v1232 = vlog2.pop %v1169
        %v1233 = vmul.f32 %v1232, 0.6931472
        %v1234 = vlog2.pop %v1171
        %v1235 = vmul.f32 %v1234, 0.6931472
        %v1236 = vsub.f32 %v1012, %v1173
        %v1237 = vsub.f32 %v1013, %v1175
        %v1238 = vsub.f32 %v1014, %v1177
        %v1239 = vsub.f32 %v1015, %v1179
        %v1240 = vsub.f32 %v1016, %v1181
        %v1241 = vsub.f32 %v1017, %v1183
        %v1242 = vsub.f32 %v1018, %v1185
        %v1243 = vsub.f32 %v1019, %v1187
        %v1244 = vsub.f32 %v1020, %v1189
        %v1245 = vsub.f32 %v1021, %v1191
        %v1246 = vsub.f32 %v1022, %v1193
        %v1247 = vsub.f32 %v1023, %v1195
        %v1248 = vsub.f32 %v1024, %v1197
        %v1249 = vsub.f32 %v1025, %v1199
        %v1250 = vsub.f32 %v1026, %v1201
        %v1251 = vsub.f32 %v1027, %v1203
        %v1252 = vsub.f32 %v1028, %v1205
        %v1253 = vsub.f32 %v1029, %v1207
        %v1254 = vsub.f32 %v1030, %v1209
        %v1255 = vsub.f32 %v1031, %v1211
        %v1256 = vsub.f32 %v1032, %v1213
        %v1257 = vsub.f32 %v1033, %v1215
        %v1258 = vsub.f32 %v1034, %v1217
        %v1259 = vsub.f32 %v1035, %v1219
        %v1260 = vsub.f32 %v1036, %v1221
        %v1261 = vsub.f32 %v1037, %v1223
        %v1262 = vsub.f32 %v1038, %v1225
        %v1263 = vsub.f32 %v1039, %v1227
        %v1264 = vsub.f32 %v1040, %v1229
        %v1265 = vsub.f32 %v1041, %v1231
        %v1266 = vsub.f32 %v1042, %v1233
        %v1267 = vsub.f32 %v1043, %v1235
        %1268 = vst [vmem:[%s272] sm:$0xff] %v1236
        %1269 = vst [vmem:[%s272 + $0x8] sm:$0xff] %v1237
        %1270 = vst [vmem:[%s272 + $0x10] sm:$0xff] %v1238
        %1271 = vst [vmem:[%s272 + $0x18] sm:$0xff] %v1239
        %1272 = vst [vmem:[%s272 + $0x20] sm:$0xff] %v1240
        %1273 = vst [vmem:[%s272 + $0x28] sm:$0xff] %v1241
        %1274 = vst [vmem:[%s272 + $0x30] sm:$0xff] %v1242
        %1275 = vst [vmem:[%s272 + $0x38] sm:$0xff] %v1243
        %1276 = vst [vmem:[%s272 + $0x40] sm:$0xff] %v1244
        %1277 = vst [vmem:[%s272 + $0x48] sm:$0xff] %v1245
        %1278 = vst [vmem:[%s272 + $0x50] sm:$0xff] %v1246
        %1279 = vst [vmem:[%s272 + $0x58] sm:$0xff] %v1247
        %1280 = vst [vmem:[%s272 + $0x60] sm:$0xff] %v1248
        %1281 = vst [vmem:[%s272 + $0x68] sm:$0xff] %v1249
        %1282 = vst [vmem:[%s272 + $0x70] sm:$0xff] %v1250
        %1283 = vst [vmem:[%s272 + $0x78] sm:$0xff] %v1251
        %1284 = vst [vmem:[%s272 + $0x80] sm:$0xff] %v1252
        %1285 = vst [vmem:[%s272 + $0x88] sm:$0xff] %v1253
        %1286 = vst [vmem:[%s272 + $0x90] sm:$0xff] %v1254
        %1287 = vst [vmem:[%s272 + $0x98] sm:$0xff] %v1255
        %1288 = vst [vmem:[%s272 + $0xa0] sm:$0xff] %v1256
        %1289 = vst [vmem:[%s272 + $0xa8] sm:$0xff] %v1257
        %1290 = vst [vmem:[%s272 + $0xb0] sm:$0xff] %v1258
        %1291 = vst [vmem:[%s272 + $0xb8] sm:$0xff] %v1259
        %1292 = vst [vmem:[%s272 + $0xc0] sm:$0xff] %v1260
        %1293 = vst [vmem:[%s272 + $0xc8] sm:$0xff] %v1261
        %1294 = vst [vmem:[%s272 + $0xd0] sm:$0xff] %v1262
        %1295 = vst [vmem:[%s272 + $0xd8] sm:$0xff] %v1263
        %1296 = vst [vmem:[%s272 + $0xe0] sm:$0xff] %v1264
        %1297 = vst [vmem:[%s272 + $0xe8] sm:$0xff] %v1265
        %1298 = vst [vmem:[%s272 + $0xf0] sm:$0xff] %v1266
        %1299 = vst [vmem:[%s272 + $0xf8] sm:$0xff] %v1267
        %s1300 = sand.u32 %s141, 1
        %s1301 = scalar_lea.sflag [#allocation4], %s1300
        %s1302 = sand.u32 %s141, 1
        %s1303 = smul.addr %s1302, 256
        %s1304 = scalar_lea.vmem [#allocation8], %s1303
        // Predicated region
        $region53: #{tpu_custom_call.1} parent=39 // pred_check
          %p1305 = pneg %p151
        $region54: #{tpu_custom_call.1} parent=39 // pred_check_branch
          %1307 = sbr.rel (%p1305) target = $region56
        $region55: #{tpu_custom_call.1} parent=39 // pred_region
          %s1308 = smul.u32 32, %s23
          %s1310 = ssub.s32 4096, 4096
          %1311 = vsyncadd %s1301, %s1310
          %s1312 = smul.addr %s1308, 128
          %s1313 = scalar_lea.hbm %s5, %s1312
          %s1314 = sshll.u32 %s1304, 4
          %s1315 = int_to_ptr.vmem [resolvable:$true] %s1314
          %1320 = dma.vmem_to_hbm [thread:$0]  %s1315, 4096, %s1313, %s1301, 128, 128, 8
        $region56: #{tpu_custom_call.1} parent=39 // pred_fallthru
          _
      $region40: #{tpu_custom_call.1} parent=5 // pred_fallthru
        _
      %p1321 = scmp.le.s32.totalorder 2, %s18
      // Predicated region
      $region57: #{tpu_custom_call.1} parent=5 // pred_check
        %p1322 = pneg %p1321
      $region58: #{tpu_custom_call.1} parent=5 // pred_check_branch
        %1324 = sbr.rel (%p1322) target = $region60
      $region59: #{tpu_custom_call.1} parent=5 // pred_region
        %s1325 = ssub.s32 %s18, 2
        // Predicated region
        $region61: #{tpu_custom_call.1} parent=59 // pred_check
          %p1326 = pneg %p157
        $region62: #{tpu_custom_call.1} parent=59 // pred_check_branch
          %1328 = sbr.rel (%p1326) target = $region64
        $region63: #{tpu_custom_call.1} parent=59 // pred_region
          %s1329 = sand.u32 %s142, 1
          %s1330 = scalar_lea.sflag [#allocation4], %s1329
          %s1331 = sand.u32 %s142, 1
          %s1332 = smul.addr %s1331, 256
          %s1333 = scalar_lea.vmem [#allocation8], %s1332
          %1334 = dma.done %s1330, 4096
        $region64: #{tpu_custom_call.1} parent=59 // pred_fallthru
          _
      $region60: #{tpu_custom_call.1} parent=5 // pred_fallthru
        _
    $region6: #{tpu_custom_call.1} parent=1 // loop_footer
      %s22 = sadd.s32 1, %s18
    $region7: #{tpu_custom_call.1} parent=1 // loop_footer_branch
      %17 = sbr.rel target = $region3
    $region8: #{tpu_custom_call.1} parent=1 // loop_exit
      _
    %1335 = vsyncpa [#allocation3], 1
    %s1336 = scalar_lea.sflag [#allocation3], 1
    %1337 = vsyncpa %s1336, 1
    %1338 = vsyncpa [#allocation6], 1
    %1339 = vsyncpa [#allocation4], 1
    %s1340 = scalar_lea.sflag [#allocation4], 1
    %1341 = vsyncpa %s1340, 1

</llo_original>
